<compile_context>
chip_gen: v6e
topology: v6e:2x2x1
jax: 0.10.0
libtpu: 0.0.40
codegen_flags: <defaults>
</compile_context>

<pallas_src>
import jax
import jax.numpy as jnp
from jax.experimental import pallas as pl
from jax.experimental.pallas import tpu as pltpu

H1, H2, H3 = 128, 64, 1  # fc1 / fc2 / fc3 output widths


def _round_up(n, m):
    return (n + m - 1) // m * m


def _mlp_kernel(x_ref, w1_ref, b1_ref, w2_ref, b2_ref, w3_ref, b3_ref, o_ref):
    """One batch tile of the fused 3-layer MLP.

    x_ref  : (TM, IN)   bf16  -- tiled over the batch grid (double-buffered)
    w1_ref : (IN, 128)  bf16  -- resident (index_map -> (0, 0) every step)
    b1_ref : (1, 128)   f32
    w2_ref : (128, 64)  bf16
    b2_ref : (1, 64)    f32
    w3_ref : (1, 64)    f32   -- fc3 weight as a row (VPU lane reduction)
    b3_ref : (1, 1)     f32   -- SMEM scalar
    o_ref  : (TM, 1)    f32
    """
    # fc1: bf16 MXU matmul with f32 accumulation; bias + ReLU in f32.
    h1 = jnp.dot(x_ref[...], w1_ref[...], preferred_element_type=jnp.float32)
    h1 = jnp.maximum(h1 + b1_ref[...], 0.0)

    # fc2: back to bf16 for the MXU, accumulate in f32.
    h2 = jnp.dot(h1.astype(jnp.bfloat16), w2_ref[...],
                 preferred_element_type=jnp.float32)
    h2 = jnp.maximum(h2 + b2_ref[...], 0.0)

    # fc3: N=1 is a degenerate MXU shape -> lane reduction on the VPU/XLU
    # against the broadcast (1, 64) weight row, then sigmoid in f32 (EUP).
    z = jnp.sum(h2 * w3_ref[...], axis=-1, keepdims=True) + b3_ref[0, 0]
    o_ref[...] = jax.nn.sigmoid(z).astype(o_ref.dtype)


def simple_nn_forward(x, params, *, block_m=256):
    """x: (B, input_size) f32. params: w1(in,128) b1(1,128) w2(128,64) b2(1,64)
    w3(64,1) b3(1,1) in f32 (PyTorch nn.Linear semantics, weights pre-transposed)."""
    B, in_size = x.shape

    # Batch tile: fill the MXU (256 rows on v6e/v7x; >=128 also fine on v5e)
    # but never pad a tiny batch up to a huge tile. Must be a multiple of 8.
    tm = min(block_m, _round_up(B, 8))
    b_pad = _round_up(B, tm)
    if b_pad != B:
        x = jnp.pad(x, ((0, b_pad - B), (0, 0)))

    # bf16 matmul inputs; accumulation stays f32 inside the kernel.
    x_bf = x.astype(jnp.bfloat16)
    w1 = params["w1"].astype(jnp.bfloat16)
    b1 = params["b1"].astype(jnp.float32)
    w2 = params["w2"].astype(jnp.bfloat16)
    b2 = params["b2"].astype(jnp.float32)
    w3_row = params["w3"].reshape(1, H2).astype(jnp.float32)
    b3 = params["b3"].reshape(1, 1).astype(jnp.float32)

    grid = (b_pad // tm,)

    flops = 2 * b_pad * (in_size * H1 + H1 * H2 + H2 * H3)
    bytes_accessed = (
        b_pad * in_size * 2 + b_pad * 4          # x in (bf16), out (f32)
        + in_size * H1 * 2 + H1 * 4              # w1, b1
        + H1 * H2 * 2 + H2 * 4                   # w2, b2
        + H2 * 4 + 4                             # w3 row, b3
    )

    out = pl.pallas_call(
        _mlp_kernel,
        out_shape=jax.ShapeDtypeStruct((b_pad, 1), jnp.float32),
        grid=grid,
        in_specs=[
            pl.BlockSpec((tm, in_size), lambda i: (i, 0)),   # x: tiled over batch
            pl.BlockSpec((in_size, H1), lambda i: (0, 0)),   # w1: resident in VMEM
            pl.BlockSpec((1, H1), lambda i: (0, 0)),         # b1
            pl.BlockSpec((H1, H2), lambda i: (0, 0)),        # w2
            pl.BlockSpec((1, H2), lambda i: (0, 0)),         # b2
            pl.BlockSpec((1, H2), lambda i: (0, 0)),         # w3 as a row
            pl.BlockSpec(memory_space=pltpu.SMEM),           # b3 scalar in SMEM
        ],
        out_specs=pl.BlockSpec((tm, 1), lambda i: (i, 0)),
        compiler_params=pltpu.CompilerParams(
            # Batch tiles are independent -> shard across TCs on v7x (harmless
            # on v5e/v6e). 64 MiB keeps headroom even on v7x's smaller VMEM.
            dimension_semantics=("parallel",),
            vmem_limit_bytes=64 * 1024 * 1024,
        ),
        cost_estimate=pl.CostEstimate(
            flops=flops,
            transcendentals=b_pad,               # one exp per sigmoid output
            bytes_accessed=bytes_accessed,
        ),
    )(x_bf, w1, b1, w2, b2, w3_row, b3)

    return out[:B]


def init_params(input_size, key):
    """Deterministic init mimicking nn.Linear: U(-1/sqrt(fan_in), +1/sqrt(fan_in)).
    Weights are stored as (in_features, out_features) = PyTorch weight transposed."""
    ks = jax.random.split(key, 6)

    def linear(kw, kb, fan_in, fan_out):
        bound = 1.0 / jnp.sqrt(jnp.float32(fan_in))
        w = jax.random.uniform(kw, (fan_in, fan_out), jnp.float32, -bound, bound)
        b = jax.random.uniform(kb, (1, fan_out), jnp.float32, -bound, bound)
        return w, b

    w1, b1 = linear(ks[0], ks[1], input_size, H1)
    w2, b2 = linear(ks[2], ks[3], H1, H2)
    w3, b3 = linear(ks[4], ks[5], H2, H3)
    return dict(w1=w1, b1=b1, w2=w2, b2=b2, w3=w3, b3=b3)


def _ref_forward(x, p):
    """Pure-JAX f32 reference of SimpleNN.forward."""
    h1 = jnp.maximum(x @ p["w1"] + p["b1"], 0.0)
    h2 = jnp.maximum(h1 @ p["w2"] + p["b2"], 0.0)
    return jax.nn.sigmoid(h2 @ p["w3"] + p["b3"])


if __name__ == "__main__":
    key = jax.random.PRNGKey(0)
    k_x, k_p = jax.random.split(key)

    batch, input_size = 8, 32
    x = jax.random.normal(k_x, (batch, input_size), jnp.float32)
    params = init_params(input_size, k_p)

    out = simple_nn_forward(x, params)
    out = jax.block_until_ready(out)

    # Sanity check against the f32 reference. Tolerance is loosened because the
    # kernel uses bf16 matmul inputs (f32 accumulation preserved).
    ref = _ref_forward(x, params)
    assert out.shape == (batch, 1)
    assert jnp.allclose(out, ref, atol=2e-2, rtol=2e-2), (
        f"max abs err {jnp.max(jnp.abs(out - ref))}")

    print("KERNEL_OK")
</pallas_src>

<mosaic_0001>
module attributes {stable_mosaic.version = 11 : i64} {
  func.func @_mlp_kernel(%arg0: i32, %arg1: memref<8x32xbf16, #tpu.memory_space<vmem>>, %arg2: memref<32x128xbf16, #tpu.memory_space<vmem>>, %arg3: memref<1x128xf32, #tpu.memory_space<vmem>>, %arg4: memref<128x64xbf16, #tpu.memory_space<vmem>>, %arg5: memref<1x64xf32, #tpu.memory_space<vmem>>, %arg6: memref<1x64xf32, #tpu.memory_space<vmem>>, %arg7: memref<1x1xf32, #tpu.memory_space<smem>>, %arg8: memref<8x1xf32, #tpu.memory_space<vmem>>) attributes {dimension_semantics = [#tpu.dimension_semantics<parallel>], iteration_bounds = array<i64: 1>, scalar_prefetch = 0 : i64, scratch_operands = 0 : i64, tpu.core_type = #tpu.core_type<tc>, window_params = [{transform_indices = @transform_0, window_bounds = array<i64: 8, 32>}, {pipeline_mode = #tpu.pipeline_mode<synchronous>, transform_indices = @transform_1, window_bounds = array<i64: 32, 128>}, {pipeline_mode = #tpu.pipeline_mode<synchronous>, transform_indices = @transform_2, window_bounds = array<i64: 1, 128>}, {pipeline_mode = #tpu.pipeline_mode<synchronous>, transform_indices = @transform_3, window_bounds = array<i64: 128, 64>}, {pipeline_mode = #tpu.pipeline_mode<synchronous>, transform_indices = @transform_4, window_bounds = array<i64: 1, 64>}, {pipeline_mode = #tpu.pipeline_mode<synchronous>, transform_indices = @transform_5, window_bounds = array<i64: 1, 64>}, {transform_indices = @transform_6, window_bounds = array<i64: 1, 1>}, {transform_indices = @transform_7, window_bounds = array<i64: 8, 1>}]} {
    %c0 = arith.constant 0 : index
    %c0_0 = arith.constant 0 : index
    %0 = vector.load %arg1[%c0, %c0_0] : memref<8x32xbf16, #tpu.memory_space<vmem>>, vector<8x32xbf16>
    %c0_1 = arith.constant 0 : index
    %c0_2 = arith.constant 0 : index
    %1 = vector.load %arg2[%c0_1, %c0_2] : memref<32x128xbf16, #tpu.memory_space<vmem>>, vector<32x128xbf16>
    %cst = arith.constant dense<0.000000e+00> : vector<8x128xf32>
    %2 = tpu.matmul %0, %1, %cst {dimension_numbers = #tpu.dot_dimension_numbers<[1], [0], [0], [1], [0, 0, 1, 1], [], []>} : vector<8x32xbf16>, vector<32x128xbf16>, vector<8x128xf32> -> vector<8x128xf32>
    %c0_3 = arith.constant 0 : index
    %c0_4 = arith.constant 0 : index
    %3 = vector.load %arg3[%c0_3, %c0_4] : memref<1x128xf32, #tpu.memory_space<vmem>>, vector<1x128xf32>
    %4 = vector.broadcast %3 : vector<1x128xf32> to vector<8x128xf32>
    %5 = arith.addf %2, %4 : vector<8x128xf32>
    %cst_5 = arith.constant 0.000000e+00 : f32
    %6 = vector.broadcast %cst_5 : f32 to vector<8x128xf32>
    %7 = arith.maximumf %5, %6 : vector<8x128xf32>
    %8 = arith.truncf %7 : vector<8x128xf32> to vector<8x128xbf16>
    %c0_6 = arith.constant 0 : index
    %c0_7 = arith.constant 0 : index
    %9 = vector.load %arg4[%c0_6, %c0_7] : memref<128x64xbf16, #tpu.memory_space<vmem>>, vector<128x64xbf16>
    %cst_8 = arith.constant dense<0.000000e+00> : vector<8x64xf32>
    %10 = tpu.matmul %8, %9, %cst_8 {dimension_numbers = #tpu.dot_dimension_numbers<[1], [0], [0], [1], [0, 0, 1, 1], [], []>} : vector<8x128xbf16>, vector<128x64xbf16>, vector<8x64xf32> -> vector<8x64xf32>
    %c0_9 = arith.constant 0 : index
    %c0_10 = arith.constant 0 : index
    %11 = vector.load %arg5[%c0_9, %c0_10] : memref<1x64xf32, #tpu.memory_space<vmem>>, vector<1x64xf32>
    %12 = vector.broadcast %11 : vector<1x64xf32> to vector<8x64xf32>
    %13 = arith.addf %10, %12 : vector<8x64xf32>
    %cst_11 = arith.constant 0.000000e+00 : f32
    %14 = vector.broadcast %cst_11 : f32 to vector<8x64xf32>
    %15 = arith.maximumf %13, %14 : vector<8x64xf32>
    %c0_12 = arith.constant 0 : index
    %c0_13 = arith.constant 0 : index
    %16 = vector.load %arg6[%c0_12, %c0_13] : memref<1x64xf32, #tpu.memory_space<vmem>>, vector<1x64xf32>
    %17 = vector.broadcast %16 : vector<1x64xf32> to vector<8x64xf32>
    %18 = arith.mulf %15, %17 : vector<8x64xf32>
    %cst_14 = arith.constant dense<0.000000e+00> : vector<8xf32>
    %19 = vector.multi_reduction <add>, %18, %cst_14 [1] : vector<8x64xf32> to vector<8xf32>
    %20 = vector.shape_cast %19 : vector<8xf32> to vector<8x1xf32>
    %c0_15 = arith.constant 0 : index
    %c0_16 = arith.constant 0 : index
    %21 = memref.load %arg7[%c0_15, %c0_16] : memref<1x1xf32, #tpu.memory_space<smem>>
    %22 = vector.broadcast %21 : f32 to vector<8x1xf32>
    %23 = arith.addf %20, %22 : vector<8x1xf32>
    %24 = arith.negf %23 : vector<8x1xf32>
    %25 = math.exp %24 : vector<8x1xf32>
    %cst_17 = arith.constant 1.000000e+00 : f32
    %26 = vector.broadcast %cst_17 : f32 to vector<8x1xf32>
    %27 = arith.addf %26, %25 : vector<8x1xf32>
    %28 = arith.divf %26, %27 : vector<8x1xf32>
    %c0_18 = arith.constant 0 : index
    %c0_19 = arith.constant 0 : index
    %29 = vector.load %arg8[%c0_18, %c0_19] : memref<8x1xf32, #tpu.memory_space<vmem>>, vector<8x1xf32>
    tpu.vector_store %arg8[%c0_18, %c0_19], %28 {strides = array<i32>} : memref<8x1xf32, #tpu.memory_space<vmem>>, vector<8x1xf32>,
    return
  }
  func.func @transform_0(%arg0: i32) -> (i32, i32) {
    %c0_i32 = arith.constant 0 : i32
    %c0_i32_0 = arith.constant 0 : i32
    return %arg0, %c0_i32 : i32, i32
  }
  func.func @transform_1(%arg0: i32) -> (i32, i32) {
    %c0_i32 = arith.constant 0 : i32
    %c0_i32_0 = arith.constant 0 : i32
    %c0_i32_1 = arith.constant 0 : i32
    return %c0_i32, %c0_i32_0 : i32, i32
  }
  func.func @transform_2(%arg0: i32) -> (i32, i32) {
    %c0_i32 = arith.constant 0 : i32
    %c0_i32_0 = arith.constant 0 : i32
    %c0_i32_1 = arith.constant 0 : i32
    return %c0_i32, %c0_i32_0 : i32, i32
  }
  func.func @transform_3(%arg0: i32) -> (i32, i32) {
    %c0_i32 = arith.constant 0 : i32
    %c0_i32_0 = arith.constant 0 : i32
    %c0_i32_1 = arith.constant 0 : i32
    return %c0_i32, %c0_i32_0 : i32, i32
  }
  func.func @transform_4(%arg0: i32) -> (i32, i32) {
    %c0_i32 = arith.constant 0 : i32
    %c0_i32_0 = arith.constant 0 : i32
    %c0_i32_1 = arith.constant 0 : i32
    return %c0_i32, %c0_i32_0 : i32, i32
  }
  func.func @transform_5(%arg0: i32) -> (i32, i32) {
    %c0_i32 = arith.constant 0 : i32
    %c0_i32_0 = arith.constant 0 : i32
    %c0_i32_1 = arith.constant 0 : i32
    return %c0_i32, %c0_i32_0 : i32, i32
  }
  func.func @transform_6(%arg0: i32) -> (i32, i32) {
    %c0_i32 = arith.constant 0 : i32
    %c0_i32_0 = arith.constant 0 : i32
    %c0_i32_1 = arith.constant 0 : i32
    return %c0_i32, %c0_i32_0 : i32, i32
  }
  func.func @transform_7(%arg0: i32) -> (i32, i32) {
    %c0_i32 = arith.constant 0 : i32
    %c0_i32_0 = arith.constant 0 : i32
    return %arg0, %c0_i32 : i32, i32
  }
}

</mosaic_0001>

<llo_original>
// kernel: tpu_custom_call.1
$region0: #{tpu_custom_call.1}
  #allocation0 [shape = 'u32[]', space=smem, size = 0x4, offset = 0x4, fixed_abs, tag = 'smem constant byte address 0x4 - core index']
  #allocation1 [shape = 'u32[144,128]{1,0:T(1,128)}', space=vmem, size = 0x12000, scoped, tag = 'internal scratch']
  #allocation2 [shape = 'f32[1,1]{1,0:T(1,128)S(6)}', space=smem, size = 0x200, scoped, tag = 'scoped memory for tpu_custom_call.1']
  %s0 = inlined_call_operand.vmem [shape: bf16[8,32], index: 0, kind: input, shape index: {}]
  %s1 = inlined_call_operand.vmem [shape: bf16[32,128], index: 1, kind: input, shape index: {}]
  %s2 = inlined_call_operand.vmem [shape: f32[1,128], index: 2, kind: input, shape index: {}]
  %s3 = inlined_call_operand.vmem [shape: bf16[128,64], index: 3, kind: input, shape index: {}]
  %s4 = inlined_call_operand.vmem [shape: f32[1,64], index: 4, kind: input, shape index: {}]
  %s5 = inlined_call_operand.vmem [shape: f32[1,64], index: 5, kind: input, shape index: {}]
  %s6 = inlined_call_operand.<no memory space> [shape: f32[1,1], index: 6, kind: input, shape index: {}]
  %s7 = inlined_call_operand.vmem [shape: f32[8,1], index: 7, kind: output, shape index: {}]
  %s8 = sld [smem:[#allocation0]]
  $region38: #{tpu_custom_call.1} parent=0
    _
  %s10 = ssub.s32 1, %s8
  %s11 = scalar_select 0, %s10, %s8
  %12 = sst [smem:[#allocation2]] %s6
  // Predicated region
  $region2: #{tpu_custom_call.1} parent=0 // pred_check
    _
  $region3: #{tpu_custom_call.1} parent=0 // pred_check_branch
    %14 = sbr.rel (0) target = $region5
  $region4: #{tpu_custom_call.1} parent=0 // pred_region
    _
  $region5: #{tpu_custom_call.1} parent=0 // pred_fallthru
    _
  // Predicated region
  $region6: #{tpu_custom_call.1} parent=0 // pred_check
    _
  $region7: #{tpu_custom_call.1} parent=0 // pred_check_branch
    %16 = sbr.rel (0) target = $region9
  $region8: #{tpu_custom_call.1} parent=0 // pred_region
    _
  $region9: #{tpu_custom_call.1} parent=0 // pred_fallthru
    _
  // Predicated region
  $region10: #{tpu_custom_call.1} parent=0 // pred_check
    _
  $region11: #{tpu_custom_call.1} parent=0 // pred_check_branch
    %18 = sbr.rel (0) target = $region13
  $region12: #{tpu_custom_call.1} parent=0 // pred_region
    _
  $region13: #{tpu_custom_call.1} parent=0 // pred_fallthru
    _
  // Predicated region
  $region14: #{tpu_custom_call.1} parent=0 // pred_check
    _
  $region15: #{tpu_custom_call.1} parent=0 // pred_check_branch
    %20 = sbr.rel (0) target = $region17
  $region16: #{tpu_custom_call.1} parent=0 // pred_region
    _
  $region17: #{tpu_custom_call.1} parent=0 // pred_fallthru
    _
  // Predicated region
  $region18: #{tpu_custom_call.1} parent=0 // pred_check
    _
  $region19: #{tpu_custom_call.1} parent=0 // pred_check_branch
    %22 = sbr.rel (0) target = $region21
  $region20: #{tpu_custom_call.1} parent=0 // pred_region
    _
  $region21: #{tpu_custom_call.1} parent=0 // pred_fallthru
    _
  // Predicated region
  $region22: #{tpu_custom_call.1} parent=0 // pred_check
    _
  $region23: #{tpu_custom_call.1} parent=0 // pred_check_branch
    %24 = sbr.rel (0) target = $region25
  $region24: #{tpu_custom_call.1} parent=0 // pred_region
    _
  $region25: #{tpu_custom_call.1} parent=0 // pred_fallthru
    _
  // Predicated region
  $region26: #{tpu_custom_call.1} parent=0 // pred_check
    _
  $region27: #{tpu_custom_call.1} parent=0 // pred_check_branch
    %26 = sbr.rel (0) target = $region29
  $region28: #{tpu_custom_call.1} parent=0 // pred_region
    _
  $region29: #{tpu_custom_call.1} parent=0 // pred_fallthru
    _
  %v28 = vld [vmem:[%s0] sm:$0xf]
  %v29 = vld [vmem:[%s1] sm:$0xf]
  %v30 = vld [vmem:[%s1 + $0x4] sm:$0xf]
  %v31 = vld [vmem:[%s1 + $0x8] sm:$0xf]
  %v32 = vld [vmem:[%s1 + $0xc] sm:$0xf]
  %v33 = vld [vmem:[%s2] sm:$0x1]
  %v35 = vlaneseq
  %v36 = vshrl.u32 %v35, 7
  %v37 = vsub.s32 0, %v36
  %v38 = vrot.slane %v33, %v37
  %v44 = vunpack.c.l.b16 %v29
  %v45 = vunpack.c.l.b16 %v30
  %v46 = vunpack.c.l.b16 %v31
  %v47 = vunpack.c.l.b16 %v32
  %v48 = vpack.c.b16 %v45, %v44
  %v49 = vpack.c.b16 %v47, %v46
  %vm52 = vcmask 261120
  %v54 = vsel %vm52, %v28, 0
  %56 = vmatprep.subr.bf16.mxu0 0
  %57 = vmatpush1.bf16.msra.mxu0 0
  %58 = vmatprep.subr.bf16.mxu0 0
  %59 = vmatpush1.bf16.msra.mxu0 0
  %60 = vmatprep.subr.bf16.mxu0 0
  %61 = vmatpush1.bf16.msra.mxu0 0
  %62 = vmatprep.subr.bf16.mxu0 0
  %63 = vmatpush1.bf16.msra.mxu0 0
  %64 = vmatprep.subr.bf16.mxu0 0
  %65 = vmatpush1.bf16.msra.mxu0 0
  %66 = vmatprep.subr.bf16.mxu0 0
  %67 = vmatpush1.bf16.msra.mxu0 0
  %68 = vmatprep.subr.bf16.mxu0 0
  %69 = vmatpush1.bf16.msra.mxu0 %v49
  %70 = vmatprep.subr.bf16.mxu0 0
  %71 = vmatpush1.bf16.msra.mxu0 %v48
  %72 = vmatprep.subr.bf16.mxu0 0
  %73 = vmatpush2.bf16.msra.mxu0 0
  %74 = vmatprep.subr.bf16.mxu0 0
  %75 = vmatpush2.bf16.msra.mxu0 0
  %76 = vmatprep.subr.bf16.mxu0 0
  %77 = vmatpush2.bf16.msra.mxu0 0
  %78 = vmatprep.subr.bf16.mxu0 0
  %79 = vmatpush2.bf16.msra.mxu0 0
  %80 = vmatprep.subr.bf16.mxu0 0
  %81 = vmatpush2.bf16.msra.mxu0 0
  %82 = vmatprep.subr.bf16.mxu0 0
  %83 = vmatpush2.bf16.msra.mxu0 0
  %84 = vmatprep.subr.bf16.mxu0 0
  %85 = vmatpush2.bf16.msra.mxu0 0
  %86 = vmatprep.subr.bf16.mxu0 0
  %87 = vmatpush2.bf16.msra.mxu0 0
  %88 = vmatprep.mubr.bf16.mxu0 0
  %89 = vmatmul.mubr.bf16.gmra.mxu0 %v54
  %v90 = vpop.f32.mrf.mxu0
  %v91 = vadd.f32 %v38, %v90
  %v92 = vpop.f32.mrf.mxu0
  %v93 = vpop.f32.mrf.mxu0
  %v94 = vpop.f32.mrf.mxu0
  %95 = vdwg.mxu0
  %v96 = vmax.f32 %v91, 0.0
  %v97 = vpack.c.bf16 %v96, %v96
  %v98 = vld [vmem:[%s3] sm:$0xf]
  %v99 = vld [vmem:[%s3 + $0x4] sm:$0xf]
  %v100 = vld [vmem:[%s3 + $0x8] sm:$0xf]
  %v101 = vld [vmem:[%s3 + $0xc] sm:$0xf]
  %v102 = vld [vmem:[%s3 + $0x10] sm:$0xf]
  %v103 = vld [vmem:[%s3 + $0x14] sm:$0xf]
  %v104 = vld [vmem:[%s3 + $0x18] sm:$0xf]
  %v105 = vld [vmem:[%s3 + $0x1c] sm:$0xf]
  %v106 = vld [vmem:[%s3 + $0x20] sm:$0xf]
  %v107 = vld [vmem:[%s3 + $0x24] sm:$0xf]
  %v108 = vld [vmem:[%s3 + $0x28] sm:$0xf]
  %v109 = vld [vmem:[%s3 + $0x2c] sm:$0xf]
  %v110 = vld [vmem:[%s3 + $0x30] sm:$0xf]
  %v111 = vld [vmem:[%s3 + $0x34] sm:$0xf]
  %v112 = vld [vmem:[%s3 + $0x38] sm:$0xf]
  %v113 = vld [vmem:[%s3 + $0x3c] sm:$0xf]
  %v114 = vld [vmem:[%s4] sm:$0x1]
  %v116 = vlaneseq
  %v117 = vshrl.u32 %v116, 7
  %v118 = vsub.s32 0, %v117
  %v119 = vrot.slane %v114, %v118
  %v137 = vunpack.c.l.b16 %v98
  %v138 = vunpack.c.l.b16 %v99
  %v139 = vunpack.c.l.b16 %v100
  %v140 = vunpack.c.l.b16 %v101
  %v141 = vunpack.c.l.b16 %v102
  %v142 = vunpack.c.l.b16 %v103
  %v143 = vunpack.c.l.b16 %v104
  %v144 = vunpack.c.l.b16 %v105
  %v145 = vunpack.c.l.b16 %v106
  %v146 = vunpack.c.l.b16 %v107
  %v147 = vunpack.c.l.b16 %v108
  %v148 = vunpack.c.l.b16 %v109
  %v149 = vunpack.c.l.b16 %v110
  %v150 = vunpack.c.l.b16 %v111
  %v151 = vunpack.c.l.b16 %v112
  %v152 = vunpack.c.l.b16 %v113
  %v153 = vpack.c.b16 %v138, %v137
  %v154 = vpack.c.b16 %v140, %v139
  %v155 = vpack.c.b16 %v142, %v141
  %v156 = vpack.c.b16 %v144, %v143
  %v157 = vpack.c.b16 %v146, %v145
  %v158 = vpack.c.b16 %v148, %v147
  %v159 = vpack.c.b16 %v150, %v149
  %v160 = vpack.c.b16 %v152, %v151
  %169 = vmatprep.subr.bf16.mxu0 0
  %170 = vmatpush1.bf16.msra.mxu0 %v160
  %171 = vmatprep.subr.bf16.mxu0 0
  %172 = vmatpush1.bf16.msra.mxu0 %v159
  %173 = vmatprep.subr.bf16.mxu0 0
  %174 = vmatpush1.bf16.msra.mxu0 %v158
  %175 = vmatprep.subr.bf16.mxu0 0
  %176 = vmatpush1.bf16.msra.mxu0 %v157
  %177 = vmatprep.subr.bf16.mxu0 0
  %178 = vmatpush1.bf16.msra.mxu0 %v156
  %179 = vmatprep.subr.bf16.mxu0 0
  %180 = vmatpush1.bf16.msra.mxu0 %v155
  %181 = vmatprep.subr.bf16.mxu0 0
  %182 = vmatpush1.bf16.msra.mxu0 %v154
  %183 = vmatprep.subr.bf16.mxu0 0
  %184 = vmatpush1.bf16.msra.mxu0 %v153
  %185 = vmatprep.subr.bf16.mxu0 0
  %186 = vmatpush2.bf16.msra.mxu0 0
  %187 = vmatprep.subr.bf16.mxu0 0
  %188 = vmatpush2.bf16.msra.mxu0 0
  %189 = vmatprep.subr.bf16.mxu0 0
  %190 = vmatpush2.bf16.msra.mxu0 0
  %191 = vmatprep.subr.bf16.mxu0 0
  %192 = vmatpush2.bf16.msra.mxu0 0
  %193 = vmatprep.subr.bf16.mxu0 0
  %194 = vmatpush2.bf16.msra.mxu0 0
  %195 = vmatprep.subr.bf16.mxu0 0
  %196 = vmatpush2.bf16.msra.mxu0 0
  %197 = vmatprep.subr.bf16.mxu0 0
  %198 = vmatpush2.bf16.msra.mxu0 0
  %199 = vmatprep.subr.bf16.mxu0 0
  %200 = vmatpush2.bf16.msra.mxu0 0
  %201 = vmatprep.mubr.bf16.mxu0 0
  %202 = vmatmul.mubr.bf16.gmra.mxu0 %v97
  %v203 = vpop.f32.mrf.mxu0
  %v204 = vadd.f32 %v119, %v203
  %v205 = vpop.f32.mrf.mxu0
  %v206 = vpop.f32.mrf.mxu0
  %v207 = vpop.f32.mrf.mxu0
  %208 = vdwg.mxu0
  %v209 = vmax.f32 %v204, 0.0
  %v210 = vld [vmem:[%s5] sm:$0x1]
  %v212 = vlaneseq
  %v213 = vshrl.u32 %v212, 7
  %v214 = vsub.s32 0, %v213
  %v215 = vrot.slane %v210, %v214
  %v217 = vmul.f32 %v209, %v215
  %vm218 = vcmask 523264
  %v219 = vsel %vm218, %v217, 0.0
  %220 = vadd.xlane.f32.xlu0 %v219
  %v221 = vpop.xlane.xlu0 %220
  %s222 = sld [smem:[#allocation2]]
  %v223 = vstv %s222
  %v224 = vadd.f32 %v221, %v223
  %v225 = vxor.u32 %v224, 2147483648
  %v226 = vmul.f32 %v225, 1.442695
  %v227 = vpow.pop %v226
  %v228 = vadd.f32 %v227, 1.0
  %v229 = vrcp.pop %v228
  %v230 = vmul.f32 1.0, %v229
  %vm231 = vcmask 7168
  %232 = vst.msk [vmem:[%s7] sm:$0xff] %vm231, %v230
  // Predicated region
  $region30: #{tpu_custom_call.1} parent=0 // pred_check
    _
  $region31: #{tpu_custom_call.1} parent=0 // pred_check_branch
    %234 = sbr.rel (0) target = $region33
  $region32: #{tpu_custom_call.1} parent=0 // pred_region
    _
  $region33: #{tpu_custom_call.1} parent=0 // pred_fallthru
    _
  // Predicated region
  $region34: #{tpu_custom_call.1} parent=0 // pred_check
    _
  $region35: #{tpu_custom_call.1} parent=0 // pred_check_branch
    %236 = sbr.rel (0) target = $region37
  $region36: #{tpu_custom_call.1} parent=0 // pred_region
    _
  $region37: #{tpu_custom_call.1} parent=0 // pred_fallthru
    _

</llo_original>
